<compile_context>
chip_gen: v6e
topology: v6e:2x2x1
jax: 0.10.0
libtpu: 0.0.40
codegen_flags: <defaults>
</compile_context>

<pallas_src>
import math

import jax
import jax.numpy as jnp
from jax.experimental import pallas as pl
from jax.experimental.pallas import tpu as pltpu


# Keep a handful of large copies in flight; more adds no bandwidth, just
# semaphores and descriptor overhead.
_MAX_DMAS_IN_FLIGHT = 4

# Widest lane counts first: wide, 128-aligned slabs keep the HBM layout dense
# (no padded lanes).
_LANE_CANDIDATES = (32768, 16384, 8192, 4096, 2048, 1024, 512, 256, 128)
# Keep at least this many rows so several row-chunk DMAs can be in flight and
# the second-to-last dim is not sub-sublane.
_MIN_ROWS = 8


def _make_dma_copy_kernel(row_chunks):
    """Build a kernel copying the given static row chunks directly HBM->HBM."""

    def kernel(x_hbm, o_hbm, sems):
        copies = []
        for k, (start, nrows) in enumerate(row_chunks):
            cp = pltpu.make_async_copy(
                x_hbm.at[pl.ds(start, nrows), :],
                o_hbm.at[pl.ds(start, nrows), :],
                sems.at[k],
            )
            cp.start()  # issue; all chunks end up in flight simultaneously
            copies.append(cp)
        for cp in copies:
            cp.wait()

    return kernel


def _identity_copy_2d(x2d: jax.Array) -> jax.Array:
    """Identity copy of a 2-D slab via direct HBM->HBM DMA (no VMEM staging)."""
    rows, lanes = x2d.shape
    itemsize = jnp.dtype(x2d.dtype).itemsize
    total_bytes = rows * lanes * itemsize

    # Sublane quantum: 8 rows for 4-byte, 16 for 2-byte, 32 for 1-byte dtypes.
    sub = max(1, 32 // itemsize)

    # Static, sublane-aligned row chunks (last chunk may be shorter; it ends
    # at the array boundary so it stays a legal full-extent slice).
    if rows >= sub:
        n_chunks = max(1, min(_MAX_DMAS_IN_FLIGHT, rows // sub))
    else:
        n_chunks = 1
    chunk_rows = -(-rows // n_chunks)              # ceil
    chunk_rows = -(-chunk_rows // sub) * sub       # round up to sublane quantum
    row_chunks = []
    r0 = 0
    while r0 < rows:
        sz = min(chunk_rows, rows - r0)
        row_chunks.append((r0, sz))
        r0 += sz

    return pl.pallas_call(
        _make_dma_copy_kernel(tuple(row_chunks)),
        out_shape=jax.ShapeDtypeStruct((rows, lanes), x2d.dtype),
        # No grid: one invocation issuing all DMAs.  Both operands stay in
        # HBM (pl.ANY) -> no BlockSpec pipeline, no per-step overhead.
        in_specs=[pl.BlockSpec(memory_space=pl.ANY)],
        out_specs=pl.BlockSpec(memory_space=pl.ANY),
        scratch_shapes=[pltpu.SemaphoreType.DMA((len(row_chunks),))],
        # Pure-bandwidth op: tell XLA's scheduler so it can overlap neighbors.
        cost_estimate=pl.CostEstimate(
            flops=0, transcendentals=0, bytes_accessed=2 * total_bytes
        ),
        # NOTE: in production, add input_output_aliases={0: 0} and donate the
        # input to elide the second HBM buffer entirely; left off here so the
        # copy being exercised actually happens.
    )(x2d)


def _pick_slab_shape(total: int, b: int, size: int):
    """Choose a (rows, lanes) factorization of `total` for the copy."""
    fallback = None
    for cand in _LANE_CANDIDATES:
        if total % cand == 0:
            rows = total // cand
            if rows >= _MIN_ROWS:
                return rows, cand          # wide AND enough rows to chunk
            if fallback is None:
                fallback = (rows, cand)    # widest 128-multiple divisor
    if fallback is not None:
        return fallback
    # total has no multiple-of-128 divisor.  Direct HBM->HBM DMA involves no
    # vector loads/stores, so a non-128 lane dim only costs some HBM layout
    # padding; keep the natural (b, size) shape.
    return b, size


def unflatten(x: jax.Array, size: int = 1024, *, use_kernel: bool = True) -> jax.Array:
    """Equivalent of PyTorch UnFlatten(size).forward(x).

    Accepts x with x.shape[0] == B and prod(x.shape[1:]) == size.
    Returns an array of shape (B, size, 1, 1) with the same dtype.
    """
    b = x.shape[0]
    trailing = int(math.prod(x.shape[1:])) if x.ndim > 1 else 1
    if trailing != size:
        raise ValueError(
            f"prod(x.shape[1:]) = {trailing} does not match size = {size}"
        )

    if not use_kernel:
        # UnFlatten is a pure view: this path is metadata-only (zero HBM
        # traffic) and is what production code should use.
        return x.reshape(b, size, 1, 1)

    total = b * size
    rows, lanes = _pick_slab_shape(total, b, size)
    out2d = _identity_copy_2d(x.reshape(rows, lanes))

    # Trailing unit spatial dims (NCHW with H=W=1): metadata-only reshape.
    return out2d.reshape(b, size, 1, 1)


if __name__ == "__main__":
    key = jax.random.PRNGKey(0)
    # Shapes consistent with the module: B=2, trailing dims (4, 16, 16)
    # flatten to size = 1024 (the module's default).
    B, C, H, W = 2, 4, 16, 16
    SIZE = C * H * W
    x = jax.random.normal(key, (B, C, H, W), dtype=jnp.float32)

    y = unflatten(x, size=SIZE)
    jax.block_until_ready(y)

    assert y.shape == (B, SIZE, 1, 1), y.shape
    assert y.dtype == x.dtype
    # Values must be an exact reshape of the input.
    assert bool(jnp.all(y == x.reshape(B, SIZE, 1, 1)))

    print("KERNEL_OK")
</pallas_src>

<mosaic_0001>
module attributes {stable_mosaic.version = 11 : i64} {
  func.func @kernel(%arg0: memref<8x256xf32, #tpu.memory_space<any>>, %arg1: memref<8x256xf32, #tpu.memory_space<any>>, %arg2: memref<1x!tpu.dma_semaphore, #tpu.memory_space<semaphore_mem>>) attributes {dimension_semantics = [], scalar_prefetch = 0 : i64, scratch_operands = 1 : i64, tpu.core_type = #tpu.core_type<tc>} {
    %c0_i32 = arith.constant 0 : i32
    %c0_i32_0 = arith.constant 0 : i32
    %c0_i32_1 = arith.constant 0 : i32
    %0 = tpu.memref_slice %arg0[%c0_i32_0, %c0_i32_1] : memref<8x256xf32, #tpu.memory_space<any>> -> memref<8x256xf32, #tpu.memory_space<any>>
    %c0_i32_2 = arith.constant 0 : i32
    %c0_i32_3 = arith.constant 0 : i32
    %1 = tpu.memref_slice %arg1[%c0_i32_2, %c0_i32_3] : memref<8x256xf32, #tpu.memory_space<any>> -> memref<8x256xf32, #tpu.memory_space<any>>
    %2 = tpu.memref_slice %arg2[%c0_i32] : memref<1x!tpu.dma_semaphore, #tpu.memory_space<semaphore_mem>> -> memref<1x!tpu.dma_semaphore, #tpu.memory_space<semaphore_mem>>
    %3 = tpu.memref_squeeze %2 : memref<1x!tpu.dma_semaphore, #tpu.memory_space<semaphore_mem>> -> memref<!tpu.dma_semaphore, #tpu.memory_space<semaphore_mem>>
    tpu.enqueue_dma source(%0 : memref<8x256xf32, #tpu.memory_space<any>>) target(%1 : memref<8x256xf32, #tpu.memory_space<any>>) target_semaphore(%3 : memref<!tpu.dma_semaphore, #tpu.memory_space<semaphore_mem>>)
    %c0_i32_4 = arith.constant 0 : i32
    %c0_i32_5 = arith.constant 0 : i32
    %c0_i32_6 = arith.constant 0 : i32
    %4 = tpu.memref_slice %arg0[%c0_i32_5, %c0_i32_6] : memref<8x256xf32, #tpu.memory_space<any>> -> memref<8x256xf32, #tpu.memory_space<any>>
    %c0_i32_7 = arith.constant 0 : i32
    %c0_i32_8 = arith.constant 0 : i32
    %5 = tpu.memref_slice %arg1[%c0_i32_7, %c0_i32_8] : memref<8x256xf32, #tpu.memory_space<any>> -> memref<8x256xf32, #tpu.memory_space<any>>
    %6 = tpu.memref_slice %arg2[%c0_i32_4] : memref<1x!tpu.dma_semaphore, #tpu.memory_space<semaphore_mem>> -> memref<1x!tpu.dma_semaphore, #tpu.memory_space<semaphore_mem>>
    %7 = tpu.memref_squeeze %6 : memref<1x!tpu.dma_semaphore, #tpu.memory_space<semaphore_mem>> -> memref<!tpu.dma_semaphore, #tpu.memory_space<semaphore_mem>>
    tpu.wait_dma2 semaphore(%7 : memref<!tpu.dma_semaphore, #tpu.memory_space<semaphore_mem>>) src(%4 : memref<8x256xf32, #tpu.memory_space<any>>) dst(%5 : memref<8x256xf32, #tpu.memory_space<any>>)
    return
  }
}

</mosaic_0001>

<llo_original>
// kernel: tpu_custom_call.1
$region0: #{tpu_custom_call.1}
  #allocation0 [shape = 'u32[]', space=smem, size = 0x4, offset = 0x4, fixed_abs, tag = 'smem constant byte address 0x4 - core index']
  #allocation1 [shape = 'u32[144,128]{1,0:T(1,128)}', space=vmem, size = 0x12000, scoped, tag = 'internal scratch']
  #allocation2 [shape = 's32[1]{0}', space=sflag, size = 0x4, scoped, tag = 'scratch operand']
  #allocation3 [shape = 's32[]', space=sflag, size = 0x4, offset = 0, fixed_abs, tag = 'sflag constant byte address 0x0 - dummy sync flag']
  #allocation4 [shape = 'u32[0]{0}', space=smem, size = 0, offset = 0, fixed_abs, tag = 'smem constant byte address 0x0 - null']
  %s0 = inlined_call_operand.hbm [shape: f32[8,256], index: 0, kind: input, shape index: {}]
  %s1 = inlined_call_operand.hbm [shape: f32[8,256], index: 1, kind: output, shape index: {}]
  %s2 = sld [smem:[#allocation0]]
  $region2: #{tpu_custom_call.1} parent=0
    _
  %s4 = ssub.s32 1, %s2
  %s5 = scalar_select 0, %s4, %s2
  %s7 = sshll.u32 1, 14
  %s8 = sxor.u32 4294967295, %s7
  %12 = dma.general %s0, 256, %s1, [#allocation2], 131072, [#allocation4], 0, 0
  %s13 = smul.u32 8, 1
  %s14 = smul.u32 %s13, 2
  %s15 = sshll.u32 %s14, 4
  %16 = dma.done [#allocation2], %s15
  %17 = vsyncmov [#allocation2]
  %s18 = vpop.sfrf %17
  %p19 = scmp.eq.s32.totalorder %s18, 0
  %p20 = pneg %p19
  %22 = shalt.err (%p20)

</llo_original>
